<compile_context>
chip_gen: v7x
topology: tpu7x:2x2x1
jax: 0.10.0
libtpu: 0.0.40
codegen_flags: <defaults>
</compile_context>

<pallas_src>
import functools

import jax
import jax.numpy as jnp
from jax.experimental import pallas as pl
from jax.experimental.pallas import tpu as pltpu


def _round_up(x, m):
    return (x + m - 1) // m * m


# ---------------------------------------------------------------------------
# Fused path: one grid step handles n_blk batch elements end to end.
# ---------------------------------------------------------------------------
def _psa_fused_kernel(x_ref, w1_ref, w2_ref, o_ref, *, inv_hw, n_blk):
    # x_ref/o_ref: (n_blk, C, HWp)   w1_ref: (C4, C)   w2_ref: (C, C4)
    w1 = w1_ref[...]
    w2 = w2_ref[...]
    for b in range(n_blk):                      # static unroll (n_blk <= 16)
        xb = x_ref[b]                                             # (C, HWp)
        # Global average pool over the lane (spatial) axis; zero padding of
        # HW does not change the sum, so divide by the true H*W.
        mean = jnp.sum(xb, axis=-1, keepdims=True) * inv_hw       # (C, 1)
        # TODO(synk): if bf16 I/O is adopted upstream, accumulate this sum in f32.
        h = jnp.maximum(
            jnp.dot(w1, mean, preferred_element_type=jnp.float32), 0.0)
        z = jnp.dot(w2, h, preferred_element_type=jnp.float32)    # (C, 1)
        attn = jax.nn.sigmoid(z)                                  # (C, 1)
        o_ref[b] = (xb * attn).astype(o_ref.dtype)


# ---------------------------------------------------------------------------
# Split path, kernel 1: spatially tiled global-average-pool + FC -> attn.
# ---------------------------------------------------------------------------
def _psa_attn_kernel(x_ref, w1_ref, w2_ref, attn_ref, acc_ref, *, inv_hw):
    # x_ref: (1, C, T)   attn_ref: (1, C, 1)   acc_ref: (C, 1) f32 scratch
    j = pl.program_id(1)

    @pl.when(j == 0)
    def _init():
        acc_ref[...] = jnp.zeros_like(acc_ref)

    acc_ref[...] += jnp.sum(x_ref[0], axis=-1,
                            keepdims=True).astype(jnp.float32)

    @pl.when(j == pl.num_programs(1) - 1)
    def _finalize():
        mean = acc_ref[...] * inv_hw                              # (C, 1)
        h = jnp.maximum(
            jnp.dot(w1_ref[...], mean,
                    preferred_element_type=jnp.float32), 0.0)     # (C4, 1)
        z = jnp.dot(w2_ref[...], h,
                    preferred_element_type=jnp.float32)           # (C, 1)
        attn_ref[0] = jax.nn.sigmoid(z)


# ---------------------------------------------------------------------------
# Split path, kernel 2: broadcast-scale x by attn, spatially tiled.
# ---------------------------------------------------------------------------
def _psa_scale_kernel(x_ref, attn_ref, o_ref):
    # x_ref/o_ref: (1, C, T)   attn_ref: (1, C, 1)
    o_ref[...] = (x_ref[...] * attn_ref[...]).astype(o_ref.dtype)


def psa_forward(x_nchw, w1, w2, *, max_block_bytes=4 * 1024 * 1024):
    """PSA forward.

    x_nchw: (N, C, H, W)
    w1:     (C//4, C)   first  1x1 conv weight (out, in), no bias
    w2:     (C, C//4)   second 1x1 conv weight (out, in), no bias
    """
    N, C, H, W = x_nchw.shape
    C4 = w1.shape[0]
    HW = H * W
    itemsize = jnp.dtype(x_nchw.dtype).itemsize
    w_bytes = (w1.size + w2.size) * jnp.dtype(w1.dtype).itemsize

    # Free reshape (no data movement for a contiguous NCHW input); spatial
    # axis stays last so every access is lane-dense.
    x3d = x_nchw.reshape(N, C, HW)

    # Lane guard: present a multiple-of-128 trailing extent to the BlockSpecs.
    hw128 = _round_up(HW, 128)
    per_batch_bytes = C * hw128 * itemsize

    if per_batch_bytes <= max_block_bytes:
        # ----------------------- fused single-pass path ---------------------
        n_blk = int(min(N, max(1, max_block_bytes // per_batch_bytes), 16))
        n_pad = _round_up(N, n_blk)
        hw_pad = hw128

        xp = x3d
        if n_pad != N or hw_pad != HW:
            xp = jnp.pad(x3d, ((0, n_pad - N), (0, 0), (0, hw_pad - HW)))

        blk_bytes = n_blk * C * hw_pad * itemsize
        # x + out double-buffered, weights (conservatively) 2x, plus headroom.
        vmem_limit = int(min(max(4 * blk_bytes + 2 * w_bytes + (4 << 20),
                                 32 << 20), 64 << 20))

        y = pl.pallas_call(
            functools.partial(_psa_fused_kernel, inv_hw=1.0 / HW, n_blk=n_blk),
            out_shape=jax.ShapeDtypeStruct((n_pad, C, hw_pad), x_nchw.dtype),
            grid_spec=pltpu.PrefetchScalarGridSpec(
                num_scalar_prefetch=0,
                grid=(n_pad // n_blk,),
                in_specs=[
                    pl.BlockSpec((n_blk, C, hw_pad), lambda i: (i, 0, 0)),
                    # Constant-index weights: a single buffer is enough.
                    pl.BlockSpec((C4, C), lambda i: (0, 0),
                                 pipeline_mode=pl.Buffered(1)),
                    pl.BlockSpec((C, C4), lambda i: (0, 0),
                                 pipeline_mode=pl.Buffered(1)),
                ],
                out_specs=pl.BlockSpec((n_blk, C, hw_pad),
                                       lambda i: (i, 0, 0)),
            ),
            compiler_params=pltpu.CompilerParams(
                dimension_semantics=("parallel",),
                vmem_limit_bytes=vmem_limit),
        )(xp, w1, w2)

        if n_pad != N or hw_pad != HW:
            y = y[:N, :, :HW]
        return y.reshape(N, C, H, W)

    # -------------------- large-feature-map two-kernel path -----------------
    # Extra read of x (1.5x ideal traffic) but stays at HBM roofline for
    # arbitrarily large H*W instead of blowing the VMEM budget.
    t_hw = max(128, (max_block_bytes // (C * itemsize)) // 128 * 128)
    hw_pad = _round_up(HW, t_hw)
    n_t = hw_pad // t_hw

    xp = x3d
    if hw_pad != HW:
        xp = jnp.pad(x3d, ((0, 0), (0, 0), (0, hw_pad - HW)))

    blk_bytes = C * t_hw * itemsize
    vmem_limit = int(min(max(4 * blk_bytes + 2 * w_bytes + (4 << 20),
                             32 << 20), 64 << 20))

    attn = pl.pallas_call(
        functools.partial(_psa_attn_kernel, inv_hw=1.0 / HW),
        out_shape=jax.ShapeDtypeStruct((N, C, 1), jnp.float32),
        grid_spec=pltpu.PrefetchScalarGridSpec(
            num_scalar_prefetch=0,
            grid=(N, n_t),
            in_specs=[
                pl.BlockSpec((1, C, t_hw), lambda n, j: (n, 0, j)),
                pl.BlockSpec((C4, C), lambda n, j: (0, 0),
                             pipeline_mode=pl.Buffered(1)),
                pl.BlockSpec((C, C4), lambda n, j: (0, 0),
                             pipeline_mode=pl.Buffered(1)),
            ],
            out_specs=pl.BlockSpec((1, C, 1), lambda n, j: (n, 0, 0)),
            scratch_shapes=[pltpu.VMEM((C, 1), jnp.float32)],
        ),
        compiler_params=pltpu.CompilerParams(
            dimension_semantics=("parallel", "arbitrary"),
            vmem_limit_bytes=vmem_limit),
    )(xp, w1, w2)

    y = pl.pallas_call(
        _psa_scale_kernel,
        out_shape=jax.ShapeDtypeStruct((N, C, hw_pad), x_nchw.dtype),
        grid_spec=pltpu.PrefetchScalarGridSpec(
            num_scalar_prefetch=0,
            grid=(N, n_t),
            in_specs=[
                pl.BlockSpec((1, C, t_hw), lambda n, j: (n, 0, j)),
                pl.BlockSpec((1, C, 1), lambda n, j: (n, 0, 0)),
            ],
            out_specs=pl.BlockSpec((1, C, t_hw), lambda n, j: (n, 0, j)),
        ),
        compiler_params=pltpu.CompilerParams(
            dimension_semantics=("parallel", "parallel"),
            vmem_limit_bytes=vmem_limit),
    )(xp, attn)

    if hw_pad != HW:
        y = y[:, :, :HW]
    return y.reshape(N, C, H, W)


class PSAPallas:
    """JAX/Pallas re-implementation of the PyTorch `PSA` module."""

    def __init__(self, channels, key):
        assert channels % 4 == 0
        self.channels = channels
        c4 = channels // 4
        k1, k2 = jax.random.split(key)
        # Deterministic init analogous to Conv2d default uniform init (no bias).
        bound1 = 1.0 / (channels ** 0.5)
        bound2 = 1.0 / (c4 ** 0.5)
        self.w1 = jax.random.uniform(k1, (c4, channels),
                                     minval=-bound1, maxval=bound1,
                                     dtype=jnp.float32)
        self.w2 = jax.random.uniform(k2, (channels, c4),
                                     minval=-bound2, maxval=bound2,
                                     dtype=jnp.float32)

    def __call__(self, x):
        return psa_forward(x, self.w1, self.w2)


if __name__ == "__main__":
    key = jax.random.PRNGKey(0)
    model_key, data_key = jax.random.split(key)

    channels = 32          # divisible by 4
    model = PSAPallas(channels, model_key)

    # Input feature map (NCHW), deterministic.
    x = jax.random.normal(data_key, (2, channels, 16, 16), dtype=jnp.float32)

    out = jax.block_until_ready(model(x))

    # Shape check: PSA preserves the input shape.
    assert out.shape == x.shape, (out.shape, x.shape)

    # Numerical check vs plain-JAX reference of the PyTorch module.
    mean = jnp.mean(x, axis=(2, 3), keepdims=True)                       # (N, C, 1, 1)
    h = jnp.maximum(jnp.einsum('oc,nchw->nohw', model.w1, mean), 0.0)    # (N, C/4, 1, 1)
    attn = jax.nn.sigmoid(jnp.einsum('oc,nchw->nohw', model.w2, h))      # (N, C, 1, 1)
    ref = x * attn
    assert jnp.allclose(out, ref, atol=1e-5, rtol=1e-5), \
        float(jnp.max(jnp.abs(out - ref)))

    # Also exercise the large-feature-map (two-kernel, spatially tiled) path
    # by forcing a tiny per-block budget.
    out_split = jax.block_until_ready(
        psa_forward(x, model.w1, model.w2, max_block_bytes=16 * 1024))
    assert jnp.allclose(out_split, ref, atol=1e-5, rtol=1e-5), \
        float(jnp.max(jnp.abs(out_split - ref)))

    print("KERNEL_OK")
</pallas_src>

<mosaic_0001>
module attributes {stable_mosaic.version = 11 : i64} {
  func.func @_psa_fused_kernel(%arg0: i32, %arg1: memref<2x32x256xf32, #tpu.memory_space<vmem>>, %arg2: memref<8x32xf32, #tpu.memory_space<vmem>>, %arg3: memref<32x8xf32, #tpu.memory_space<vmem>>, %arg4: memref<2x32x256xf32, #tpu.memory_space<vmem>>) attributes {dimension_semantics = [#tpu.dimension_semantics<parallel>], iteration_bounds = array<i64: 1>, scalar_prefetch = 0 : i64, scratch_operands = 0 : i64, tpu.core_type = #tpu.core_type<tc>, window_params = [{transform_indices = @transform_0, window_bounds = array<i64: 2, 32, 256>}, {pipeline_mode = #tpu.pipeline_mode<synchronous>, transform_indices = @transform_1, window_bounds = array<i64: 8, 32>}, {pipeline_mode = #tpu.pipeline_mode<synchronous>, transform_indices = @transform_2, window_bounds = array<i64: 32, 8>}, {transform_indices = @transform_3, window_bounds = array<i64: 2, 32, 256>}]} {
    %c0 = arith.constant 0 : index
    %c0_0 = arith.constant 0 : index
    %0 = vector.load %arg2[%c0, %c0_0] : memref<8x32xf32, #tpu.memory_space<vmem>>, vector<8x32xf32>
    %c0_1 = arith.constant 0 : index
    %c0_2 = arith.constant 0 : index
    %1 = vector.load %arg3[%c0_1, %c0_2] : memref<32x8xf32, #tpu.memory_space<vmem>>, vector<32x8xf32>
    %c0_3 = arith.constant 0 : index
    %c0_4 = arith.constant 0 : index
    %c0_5 = arith.constant 0 : index
    %2 = vector.load %arg1[%c0_3, %c0_4, %c0_5] : memref<2x32x256xf32, #tpu.memory_space<vmem>>, vector<1x32x256xf32>
    %3 = vector.shape_cast %2 : vector<1x32x256xf32> to vector<32x256xf32>
    %cst = arith.constant dense<0.000000e+00> : vector<32xf32>
    %4 = vector.multi_reduction <add>, %3, %cst [1] : vector<32x256xf32> to vector<32xf32>
    %5 = vector.shape_cast %4 : vector<32xf32> to vector<32x1xf32>
    %cst_6 = arith.constant 3.906250e-03 : f32
    %6 = vector.broadcast %cst_6 : f32 to vector<32x1xf32>
    %7 = arith.mulf %5, %6 : vector<32x1xf32>
    %cst_7 = arith.constant dense<0.000000e+00> : vector<8x1xf32>
    %8 = tpu.matmul %0, %7, %cst_7 {dimension_numbers = #tpu.dot_dimension_numbers<[1], [0], [0], [1], [0, 0, 1, 1], [], []>} : vector<8x32xf32>, vector<32x1xf32>, vector<8x1xf32> -> vector<8x1xf32>
    %cst_8 = arith.constant 0.000000e+00 : f32
    %9 = vector.broadcast %cst_8 : f32 to vector<8x1xf32>
    %10 = arith.maximumf %8, %9 : vector<8x1xf32>
    %cst_9 = arith.constant dense<0.000000e+00> : vector<32x1xf32>
    %11 = tpu.matmul %1, %10, %cst_9 {dimension_numbers = #tpu.dot_dimension_numbers<[1], [0], [0], [1], [0, 0, 1, 1], [], []>} : vector<32x8xf32>, vector<8x1xf32>, vector<32x1xf32> -> vector<32x1xf32>
    %12 = arith.negf %11 : vector<32x1xf32>
    %13 = math.exp %12 : vector<32x1xf32>
    %cst_10 = arith.constant 1.000000e+00 : f32
    %14 = vector.broadcast %cst_10 : f32 to vector<32x1xf32>
    %15 = arith.addf %14, %13 : vector<32x1xf32>
    %16 = arith.divf %14, %15 : vector<32x1xf32>
    %17 = vector.broadcast %16 : vector<32x1xf32> to vector<32x256xf32>
    %18 = arith.mulf %3, %17 : vector<32x256xf32>
    %c0_11 = arith.constant 0 : index
    %c0_12 = arith.constant 0 : index
    %c0_13 = arith.constant 0 : index
    %19 = vector.load %arg4[%c0_11, %c0_12, %c0_13] : memref<2x32x256xf32, #tpu.memory_space<vmem>>, vector<1x32x256xf32>
    %20 = vector.shape_cast %19 : vector<1x32x256xf32> to vector<32x256xf32>
    %21 = vector.shape_cast %18 : vector<32x256xf32> to vector<1x32x256xf32>
    tpu.vector_store %arg4[%c0_11, %c0_12, %c0_13], %21 {strides = array<i32>} : memref<2x32x256xf32, #tpu.memory_space<vmem>>, vector<1x32x256xf32>,
    %c1 = arith.constant 1 : index
    %c0_14 = arith.constant 0 : index
    %c0_15 = arith.constant 0 : index
    %22 = vector.load %arg1[%c1, %c0_14, %c0_15] : memref<2x32x256xf32, #tpu.memory_space<vmem>>, vector<1x32x256xf32>
    %23 = vector.shape_cast %22 : vector<1x32x256xf32> to vector<32x256xf32>
    %cst_16 = arith.constant dense<0.000000e+00> : vector<32xf32>
    %24 = vector.multi_reduction <add>, %23, %cst_16 [1] : vector<32x256xf32> to vector<32xf32>
    %25 = vector.shape_cast %24 : vector<32xf32> to vector<32x1xf32>
    %cst_17 = arith.constant 3.906250e-03 : f32
    %26 = vector.broadcast %cst_17 : f32 to vector<32x1xf32>
    %27 = arith.mulf %25, %26 : vector<32x1xf32>
    %cst_18 = arith.constant dense<0.000000e+00> : vector<8x1xf32>
    %28 = tpu.matmul %0, %27, %cst_18 {dimension_numbers = #tpu.dot_dimension_numbers<[1], [0], [0], [1], [0, 0, 1, 1], [], []>} : vector<8x32xf32>, vector<32x1xf32>, vector<8x1xf32> -> vector<8x1xf32>
    %cst_19 = arith.constant 0.000000e+00 : f32
    %29 = vector.broadcast %cst_19 : f32 to vector<8x1xf32>
    %30 = arith.maximumf %28, %29 : vector<8x1xf32>
    %cst_20 = arith.constant dense<0.000000e+00> : vector<32x1xf32>
    %31 = tpu.matmul %1, %30, %cst_20 {dimension_numbers = #tpu.dot_dimension_numbers<[1], [0], [0], [1], [0, 0, 1, 1], [], []>} : vector<32x8xf32>, vector<8x1xf32>, vector<32x1xf32> -> vector<32x1xf32>
    %32 = arith.negf %31 : vector<32x1xf32>
    %33 = math.exp %32 : vector<32x1xf32>
    %cst_21 = arith.constant 1.000000e+00 : f32
    %34 = vector.broadcast %cst_21 : f32 to vector<32x1xf32>
    %35 = arith.addf %34, %33 : vector<32x1xf32>
    %36 = arith.divf %34, %35 : vector<32x1xf32>
    %37 = vector.broadcast %36 : vector<32x1xf32> to vector<32x256xf32>
    %38 = arith.mulf %23, %37 : vector<32x256xf32>
    %c1_22 = arith.constant 1 : index
    %c0_23 = arith.constant 0 : index
    %c0_24 = arith.constant 0 : index
    %39 = vector.load %arg4[%c1_22, %c0_23, %c0_24] : memref<2x32x256xf32, #tpu.memory_space<vmem>>, vector<1x32x256xf32>
    %40 = vector.shape_cast %39 : vector<1x32x256xf32> to vector<32x256xf32>
    %41 = vector.shape_cast %38 : vector<32x256xf32> to vector<1x32x256xf32>
    tpu.vector_store %arg4[%c1_22, %c0_23, %c0_24], %41 {strides = array<i32>} : memref<2x32x256xf32, #tpu.memory_space<vmem>>, vector<1x32x256xf32>,
    return
  }
  func.func @transform_0(%arg0: i32) -> (i32, i32, i32) {
    %c0_i32 = arith.constant 0 : i32
    %c0_i32_0 = arith.constant 0 : i32
    %c0_i32_1 = arith.constant 0 : i32
    return %arg0, %c0_i32, %c0_i32_0 : i32, i32, i32
  }
  func.func @transform_1(%arg0: i32) -> (i32, i32) {
    %c0_i32 = arith.constant 0 : i32
    %c0_i32_0 = arith.constant 0 : i32
    %c0_i32_1 = arith.constant 0 : i32
    return %c0_i32, %c0_i32_0 : i32, i32
  }
  func.func @transform_2(%arg0: i32) -> (i32, i32) {
    %c0_i32 = arith.constant 0 : i32
    %c0_i32_0 = arith.constant 0 : i32
    %c0_i32_1 = arith.constant 0 : i32
    return %c0_i32, %c0_i32_0 : i32, i32
  }
  func.func @transform_3(%arg0: i32) -> (i32, i32, i32) {
    %c0_i32 = arith.constant 0 : i32
    %c0_i32_0 = arith.constant 0 : i32
    %c0_i32_1 = arith.constant 0 : i32
    return %arg0, %c0_i32, %c0_i32_0 : i32, i32, i32
  }
}

</mosaic_0001>

<llo_original>
// kernel: tpu_custom_call.1
$region0: #{tpu_custom_call.1}
  #allocation0 [shape = 'u32[]', space=smem, size = 0x4, offset = 0x4, fixed_abs, tag = 'smem constant byte address 0x4 - core index']
  #allocation1 [shape = 'u32[144,128]{1,0:T(1,128)}', space=vmem, size = 0x12000, scoped, tag = 'internal scratch']
  %s0 = inlined_call_operand.hbm [shape: f32[2,32,256], index: 0, kind: input, shape index: {}]
  %s1 = inlined_call_operand.vmem [shape: f32[8,32], index: 1, kind: input, shape index: {}]
  %s2 = inlined_call_operand.vmem [shape: f32[32,8], index: 2, kind: input, shape index: {}]
  %s3 = inlined_call_operand.hbm [shape: f32[2,32,256], index: 3, kind: output, shape index: {}]
  %s4 = sld [smem:[#allocation0]]
  $region26: #{tpu_custom_call.1} parent=0
    _
  %s6 = ssub.s32 1, %s4
  %s7 = scalar_select 0, %s6, %s4
  $region1: #{tpu_custom_call.1} parent=0
    #allocation2 [shape = 'u8[65536]{0}', space=vmem, size = 0x10000, scoped, tag = 'input window, operand 0, single buffered']
    #allocation3 [shape = 's32[1]{0}', space=sflag, size = 0x4, scoped, tag = 'scoped memory for tpu_custom_call.1']
    #allocation4 [shape = 's32[1]{0}', space=sflag, size = 0x4, scoped, tag = 'scoped memory for tpu_custom_call.1']
    #allocation5 [shape = 'u8[65536]{0}', space=vmem, size = 0x10000, scoped, tag = 'output window, operand 0, single buffered']
    %8 = vsyncpa [#allocation3], 0
    %9 = vsyncpa [#allocation4], 0
    // Predicated region
    $region2: #{tpu_custom_call.1} parent=1 // pred_check
      _
    $region3: #{tpu_custom_call.1} parent=1 // pred_check_branch
      %11 = sbr.rel (0) target = $region5
    $region4: #{tpu_custom_call.1} parent=1 // pred_region
      %s13 = ssub.s32 2048, 2048
      %14 = vsyncadd [#allocation3], %s13
      %s15 = sshll.u32 [#allocation2], 4
      %s16 = int_to_ptr.vmem [resolvable:$true] %s15
      %21 = dma.hbm_to_vmem [thread:$0]  %s0, 2048, %s16, [#allocation3], 256, 256, 16
    $region5: #{tpu_custom_call.1} parent=1 // pred_fallthru
      _
    // Predicated region
    $region6: #{tpu_custom_call.1} parent=1 // pred_check
      _
    $region7: #{tpu_custom_call.1} parent=1 // pred_check_branch
      %23 = sbr.rel (0) target = $region9
    $region8: #{tpu_custom_call.1} parent=1 // pred_region
      _
    $region9: #{tpu_custom_call.1} parent=1 // pred_fallthru
      _
    // Predicated region
    $region10: #{tpu_custom_call.1} parent=1 // pred_check
      _
    $region11: #{tpu_custom_call.1} parent=1 // pred_check_branch
      %25 = sbr.rel (0) target = $region13
    $region12: #{tpu_custom_call.1} parent=1 // pred_region
      _
    $region13: #{tpu_custom_call.1} parent=1 // pred_fallthru
      _
    // Predicated region
    $region14: #{tpu_custom_call.1} parent=1 // pred_check
      _
    $region15: #{tpu_custom_call.1} parent=1 // pred_check_branch
      %27 = sbr.rel (0) target = $region17
    $region16: #{tpu_custom_call.1} parent=1 // pred_region
      %28 = dma.done [#allocation3], 2048
    $region17: #{tpu_custom_call.1} parent=1 // pred_fallthru
      _
    %v29 = vld [vmem:[%s1] sm:$0xff]
    %v30 = vld [vmem:[%s2] sm:$0xff]
    %v31 = vld [vmem:[%s2 + $0x8] sm:$0xff]
    %v32 = vld [vmem:[%s2 + $0x10] sm:$0xff]
    %v33 = vld [vmem:[%s2 + $0x18] sm:$0xff]
    %v34 = vld [vmem:[#allocation2] sm:$0xff]
    %v35 = vld [vmem:[#allocation2 + $0x8] sm:$0xff]
    %v36 = vld [vmem:[#allocation2 + $0x10] sm:$0xff]
    %v37 = vld [vmem:[#allocation2 + $0x18] sm:$0xff]
    %v38 = vld [vmem:[#allocation2 + $0x20] sm:$0xff]
    %v39 = vld [vmem:[#allocation2 + $0x28] sm:$0xff]
    %v40 = vld [vmem:[#allocation2 + $0x30] sm:$0xff]
    %v41 = vld [vmem:[#allocation2 + $0x38] sm:$0xff]
    %v42 = vadd.f32 %v34, %v35
    %43 = vadd.xlane.f32.xlu0 %v42
    %v44 = vpop.xlane.xlu0 %43
    %v45 = vadd.f32 %v36, %v37
    %46 = vadd.xlane.f32.xlu0 %v45
    %v47 = vpop.xlane.xlu0 %46
    %v48 = vadd.f32 %v38, %v39
    %49 = vadd.xlane.f32.xlu0 %v48
    %v50 = vpop.xlane.xlu0 %49
    %v51 = vadd.f32 %v40, %v41
    %52 = vadd.xlane.f32.xlu0 %v51
    %v53 = vpop.xlane.xlu0 %52
    %v54 = vmul.f32 %v44, 0.00390625
    %v55 = vmul.f32 %v47, 0.00390625
    %v56 = vmul.f32 %v50, 0.00390625
    %v57 = vmul.f32 %v53, 0.00390625
    %vm58 = vcmask 261120
    %v60 = vsel %vm58, %v29, 0
    %62 = vmatprep.subr.mxu0 0.0
    %63 = vmatpush1.msra.mxu0 %v54
    %64 = vmatprep.subr.mxu0 0.0
    %65 = vmatpush1.msra.mxu0 %v55
    %66 = vmatprep.subr.mxu0 0.0
    %67 = vmatpush1.msra.mxu0 %v56
    %68 = vmatprep.subr.mxu0 0.0
    %69 = vmatpush1.msra.mxu0 %v57
    %70 = vmatprep.subr.mxu0 0.0
    %71 = vmatpush1.msra.mxu0 0.0
    %72 = vmatprep.subr.mxu0 0.0
    %73 = vmatpush1.msra.mxu0 0.0
    %74 = vmatprep.subr.mxu0 0.0
    %75 = vmatpush1.msra.mxu0 0.0
    %76 = vmatprep.subr.mxu0 0.0
    %77 = vmatpush1.msra.mxu0 0.0
    %78 = vmatprep.subr.mxu0 0.0
    %79 = vmatpush1.msra.mxu0 0.0
    %80 = vmatprep.subr.mxu0 0.0
    %81 = vmatpush1.msra.mxu0 0.0
    %82 = vmatprep.subr.mxu0 0.0
    %83 = vmatpush1.msra.mxu0 0.0
    %84 = vmatprep.subr.mxu0 0.0
    %85 = vmatpush1.msra.mxu0 0.0
    %86 = vmatprep.subr.mxu0 0.0
    %87 = vmatpush1.msra.mxu0 0.0
    %88 = vmatprep.subr.mxu0 0.0
    %89 = vmatpush1.msra.mxu0 0.0
    %90 = vmatprep.subr.mxu0 0.0
    %91 = vmatpush1.msra.mxu0 0.0
    %92 = vmatprep.subr.mxu0 0.0
    %93 = vmatpush1.msra.mxu0 0.0
    %94 = vmatprep.subr.mxu0 0.0
    %95 = vmatpush1.msra.mxu0 0.0
    %96 = vmatprep.subr.mxu0 0.0
    %97 = vmatpush1.msra.mxu0 0.0
    %98 = vmatprep.subr.mxu0 0.0
    %99 = vmatpush1.msra.mxu0 0.0
    %100 = vmatprep.subr.mxu0 0.0
    %101 = vmatpush1.msra.mxu0 0.0
    %102 = vmatprep.subr.mxu0 0.0
    %103 = vmatpush1.msra.mxu0 0.0
    %104 = vmatprep.subr.mxu0 0.0
    %105 = vmatpush1.msra.mxu0 0.0
    %106 = vmatprep.subr.mxu0 0.0
    %107 = vmatpush1.msra.mxu0 0.0
    %108 = vmatprep.subr.mxu0 0.0
    %109 = vmatpush1.msra.mxu0 0.0
    %110 = vmatprep.subr.mxu0 0.0
    %111 = vmatpush1.msra.mxu0 0.0
    %112 = vmatprep.subr.mxu0 0.0
    %113 = vmatpush1.msra.mxu0 0.0
    %114 = vmatprep.subr.mxu0 0.0
    %115 = vmatpush1.msra.mxu0 0.0
    %116 = vmatprep.subr.mxu0 0.0
    %117 = vmatpush1.msra.mxu0 0.0
    %118 = vmatprep.subr.mxu0 0.0
    %119 = vmatpush1.msra.mxu0 0.0
    %120 = vmatprep.subr.mxu0 0.0
    %121 = vmatpush1.msra.mxu0 0.0
    %122 = vmatprep.subr.mxu0 0.0
    %123 = vmatpush1.msra.mxu0 0.0
    %124 = vmatprep.subr.mxu0 0.0
    %125 = vmatpush1.msra.mxu0 0.0
    %126 = vmatprep.mubr.f32.mxu0 0.0
    %127 = vmatmul.mubr.f32.gmra.mrb[0].mxu0 %v60
    %v128 = vpop.f32.mrb[0].mxu0
    %v129 = vadd.f32 0.0, %v128
    %v130 = vpop.f32.mrb[0].mxu0
    %131 = vdwg.mxu0
    %v132 = vmax.f32 %v129, 0.0
    %vm133 = vcmask 64512
    %v135 = vsel %vm133, %v30, 0
    %v138 = vsel %vm133, %v31, 0
    %v141 = vsel %vm133, %v32, 0
    %v144 = vsel %vm133, %v33, 0
    %146 = vmatprep.subr.mxu0 0.0
    %147 = vmatpush1.msra.mxu0 %v132
    %148 = vmatprep.subr.mxu0 0.0
    %149 = vmatpush1.msra.mxu0 0.0
    %150 = vmatprep.subr.mxu0 0.0
    %151 = vmatpush1.msra.mxu0 0.0
    %152 = vmatprep.subr.mxu0 0.0
    %153 = vmatpush1.msra.mxu0 0.0
    %154 = vmatprep.subr.mxu0 0.0
    %155 = vmatpush1.msra.mxu0 0.0
    %156 = vmatprep.subr.mxu0 0.0
    %157 = vmatpush1.msra.mxu0 0.0
    %158 = vmatprep.subr.mxu0 0.0
    %159 = vmatpush1.msra.mxu0 0.0
    %160 = vmatprep.subr.mxu0 0.0
    %161 = vmatpush1.msra.mxu0 0.0
    %162 = vmatprep.subr.mxu0 0.0
    %163 = vmatpush1.msra.mxu0 0.0
    %164 = vmatprep.subr.mxu0 0.0
    %165 = vmatpush1.msra.mxu0 0.0
    %166 = vmatprep.subr.mxu0 0.0
    %167 = vmatpush1.msra.mxu0 0.0
    %168 = vmatprep.subr.mxu0 0.0
    %169 = vmatpush1.msra.mxu0 0.0
    %170 = vmatprep.subr.mxu0 0.0
    %171 = vmatpush1.msra.mxu0 0.0
    %172 = vmatprep.subr.mxu0 0.0
    %173 = vmatpush1.msra.mxu0 0.0
    %174 = vmatprep.subr.mxu0 0.0
    %175 = vmatpush1.msra.mxu0 0.0
    %176 = vmatprep.subr.mxu0 0.0
    %177 = vmatpush1.msra.mxu0 0.0
    %178 = vmatprep.subr.mxu0 0.0
    %179 = vmatpush1.msra.mxu0 0.0
    %180 = vmatprep.subr.mxu0 0.0
    %181 = vmatpush1.msra.mxu0 0.0
    %182 = vmatprep.subr.mxu0 0.0
    %183 = vmatpush1.msra.mxu0 0.0
    %184 = vmatprep.subr.mxu0 0.0
    %185 = vmatpush1.msra.mxu0 0.0
    %186 = vmatprep.subr.mxu0 0.0
    %187 = vmatpush1.msra.mxu0 0.0
    %188 = vmatprep.subr.mxu0 0.0
    %189 = vmatpush1.msra.mxu0 0.0
    %190 = vmatprep.subr.mxu0 0.0
    %191 = vmatpush1.msra.mxu0 0.0
    %192 = vmatprep.subr.mxu0 0.0
    %193 = vmatpush1.msra.mxu0 0.0
    %194 = vmatprep.subr.mxu0 0.0
    %195 = vmatpush1.msra.mxu0 0.0
    %196 = vmatprep.subr.mxu0 0.0
    %197 = vmatpush1.msra.mxu0 0.0
    %198 = vmatprep.subr.mxu0 0.0
    %199 = vmatpush1.msra.mxu0 0.0
    %200 = vmatprep.subr.mxu0 0.0
    %201 = vmatpush1.msra.mxu0 0.0
    %202 = vmatprep.subr.mxu0 0.0
    %203 = vmatpush1.msra.mxu0 0.0
    %204 = vmatprep.subr.mxu0 0.0
    %205 = vmatpush1.msra.mxu0 0.0
    %206 = vmatprep.subr.mxu0 0.0
    %207 = vmatpush1.msra.mxu0 0.0
    %208 = vmatprep.subr.mxu0 0.0
    %209 = vmatpush1.msra.mxu0 0.0
    %210 = vmatprep.mubr.f32.mxu0 0.0
    %211 = vmatmul.mubr.f32.gmra.mrb[0].mxu0 %v135
    %v212 = vpop.f32.mrb[0].mxu0
    %v213 = vadd.f32 0.0, %v212
    %v214 = vpop.f32.mrb[0].mxu0
    %215 = vmatprep.mubr.f32.mxu0 0.0
    %216 = vmatmul.mubr.f32.gmra.mrb[0].mxu0 %v138
    %v217 = vpop.f32.mrb[0].mxu0
    %v218 = vadd.f32 0.0, %v217
    %v219 = vpop.f32.mrb[0].mxu0
    %220 = vmatprep.mubr.f32.mxu0 0.0
    %221 = vmatmul.mubr.f32.gmra.mrb[0].mxu0 %v141
    %v222 = vpop.f32.mrb[0].mxu0
    %v223 = vadd.f32 0.0, %v222
    %v224 = vpop.f32.mrb[0].mxu0
    %225 = vmatprep.mubr.f32.mxu0 0.0
    %226 = vmatmul.mubr.f32.gmra.mrb[0].mxu0 %v144
    %v227 = vpop.f32.mrb[0].mxu0
    %v228 = vadd.f32 0.0, %v227
    %v229 = vpop.f32.mrb[0].mxu0
    %230 = vdwg.mxu0
    %v231 = vxor.u32 %v213, 2147483648
    %v232 = vxor.u32 %v218, 2147483648
    %v233 = vxor.u32 %v223, 2147483648
    %v234 = vxor.u32 %v228, 2147483648
    %v235 = vmul.f32 %v231, 1.442695
    %v236 = vpow.pop %v235
    %v237 = vmul.f32 %v232, 1.442695
    %v238 = vpow.pop %v237
    %v239 = vmul.f32 %v233, 1.442695
    %v240 = vpow.pop %v239
    %v241 = vmul.f32 %v234, 1.442695
    %v242 = vpow.pop %v241
    %v243 = vadd.f32 %v236, 1.0
    %v244 = vadd.f32 %v238, 1.0
    %v245 = vadd.f32 %v240, 1.0
    %v246 = vadd.f32 %v242, 1.0
    %v247 = vrcp.pop %v243
    %v248 = vmul.f32 1.0, %v247
    %v249 = vrcp.pop %v244
    %v250 = vmul.f32 1.0, %v249
    %v251 = vrcp.pop %v245
    %v252 = vmul.f32 1.0, %v251
    %v253 = vrcp.pop %v246
    %v254 = vmul.f32 1.0, %v253
    %256 = vset.pattern.permute.xlu0 0
    %257 = vperm.xlu0 %256, %v248
    %v258 = vpop.permute.xlu0 %257
    %261 = vset.pattern.permute.xlu0 0
    %262 = vperm.xlu0 %261, %v250
    %v263 = vpop.permute.xlu0 %262
    %266 = vset.pattern.permute.xlu0 0
    %267 = vperm.xlu0 %266, %v252
    %v268 = vpop.permute.xlu0 %267
    %271 = vset.pattern.permute.xlu0 0
    %272 = vperm.xlu0 %271, %v254
    %v273 = vpop.permute.xlu0 %272
    %v275 = vmul.f32 %v34, %v258
    %v276 = vmul.f32 %v35, %v258
    %v277 = vmul.f32 %v36, %v263
    %v278 = vmul.f32 %v37, %v263
    %v279 = vmul.f32 %v38, %v268
    %v280 = vmul.f32 %v39, %v268
    %v281 = vmul.f32 %v40, %v273
    %v282 = vmul.f32 %v41, %v273
    %283 = vst [vmem:[#allocation5] sm:$0xff] %v275
    %284 = vst [vmem:[#allocation5 + $0x8] sm:$0xff] %v276
    %285 = vst [vmem:[#allocation5 + $0x10] sm:$0xff] %v277
    %286 = vst [vmem:[#allocation5 + $0x18] sm:$0xff] %v278
    %287 = vst [vmem:[#allocation5 + $0x20] sm:$0xff] %v279
    %288 = vst [vmem:[#allocation5 + $0x28] sm:$0xff] %v280
    %289 = vst [vmem:[#allocation5 + $0x30] sm:$0xff] %v281
    %290 = vst [vmem:[#allocation5 + $0x38] sm:$0xff] %v282
    %s291 = scalar_lea.vmem [#allocation2], 64
    %v292 = vld [vmem:[%s291] sm:$0xff]
    %v293 = vld [vmem:[%s291 + $0x8] sm:$0xff]
    %v294 = vld [vmem:[%s291 + $0x10] sm:$0xff]
    %v295 = vld [vmem:[%s291 + $0x18] sm:$0xff]
    %v296 = vld [vmem:[%s291 + $0x20] sm:$0xff]
    %v297 = vld [vmem:[%s291 + $0x28] sm:$0xff]
    %v298 = vld [vmem:[%s291 + $0x30] sm:$0xff]
    %v299 = vld [vmem:[%s291 + $0x38] sm:$0xff]
    %v300 = vadd.f32 %v292, %v293
    %301 = vadd.xlane.f32.xlu0 %v300
    %v302 = vpop.xlane.xlu0 %301
    %v303 = vadd.f32 %v294, %v295
    %304 = vadd.xlane.f32.xlu0 %v303
    %v305 = vpop.xlane.xlu0 %304
    %v306 = vadd.f32 %v296, %v297
    %307 = vadd.xlane.f32.xlu0 %v306
    %v308 = vpop.xlane.xlu0 %307
    %v309 = vadd.f32 %v298, %v299
    %310 = vadd.xlane.f32.xlu0 %v309
    %v311 = vpop.xlane.xlu0 %310
    %v312 = vmul.f32 %v302, 0.00390625
    %v313 = vmul.f32 %v305, 0.00390625
    %v314 = vmul.f32 %v308, 0.00390625
    %v315 = vmul.f32 %v311, 0.00390625
    %316 = vmatprep.subr.mxu0 0.0
    %317 = vmatpush1.msra.mxu0 %v312
    %318 = vmatprep.subr.mxu0 0.0
    %319 = vmatpush1.msra.mxu0 %v313
    %320 = vmatprep.subr.mxu0 0.0
    %321 = vmatpush1.msra.mxu0 %v314
    %322 = vmatprep.subr.mxu0 0.0
    %323 = vmatpush1.msra.mxu0 %v315
    %324 = vmatprep.subr.mxu0 0.0
    %325 = vmatpush1.msra.mxu0 0.0
    %326 = vmatprep.subr.mxu0 0.0
    %327 = vmatpush1.msra.mxu0 0.0
    %328 = vmatprep.subr.mxu0 0.0
    %329 = vmatpush1.msra.mxu0 0.0
    %330 = vmatprep.subr.mxu0 0.0
    %331 = vmatpush1.msra.mxu0 0.0
    %332 = vmatprep.subr.mxu0 0.0
    %333 = vmatpush1.msra.mxu0 0.0
    %334 = vmatprep.subr.mxu0 0.0
    %335 = vmatpush1.msra.mxu0 0.0
    %336 = vmatprep.subr.mxu0 0.0
    %337 = vmatpush1.msra.mxu0 0.0
    %338 = vmatprep.subr.mxu0 0.0
    %339 = vmatpush1.msra.mxu0 0.0
    %340 = vmatprep.subr.mxu0 0.0
    %341 = vmatpush1.msra.mxu0 0.0
    %342 = vmatprep.subr.mxu0 0.0
    %343 = vmatpush1.msra.mxu0 0.0
    %344 = vmatprep.subr.mxu0 0.0
    %345 = vmatpush1.msra.mxu0 0.0
    %346 = vmatprep.subr.mxu0 0.0
    %347 = vmatpush1.msra.mxu0 0.0
    %348 = vmatprep.subr.mxu0 0.0
    %349 = vmatpush1.msra.mxu0 0.0
    %350 = vmatprep.subr.mxu0 0.0
    %351 = vmatpush1.msra.mxu0 0.0
    %352 = vmatprep.subr.mxu0 0.0
    %353 = vmatpush1.msra.mxu0 0.0
    %354 = vmatprep.subr.mxu0 0.0
    %355 = vmatpush1.msra.mxu0 0.0
    %356 = vmatprep.subr.mxu0 0.0
    %357 = vmatpush1.msra.mxu0 0.0
    %358 = vmatprep.subr.mxu0 0.0
    %359 = vmatpush1.msra.mxu0 0.0
    %360 = vmatprep.subr.mxu0 0.0
    %361 = vmatpush1.msra.mxu0 0.0
    %362 = vmatprep.subr.mxu0 0.0
    %363 = vmatpush1.msra.mxu0 0.0
    %364 = vmatprep.subr.mxu0 0.0
    %365 = vmatpush1.msra.mxu0 0.0
    %366 = vmatprep.subr.mxu0 0.0
    %367 = vmatpush1.msra.mxu0 0.0
    %368 = vmatprep.subr.mxu0 0.0
    %369 = vmatpush1.msra.mxu0 0.0
    %370 = vmatprep.subr.mxu0 0.0
    %371 = vmatpush1.msra.mxu0 0.0
    %372 = vmatprep.subr.mxu0 0.0
    %373 = vmatpush1.msra.mxu0 0.0
    %374 = vmatprep.subr.mxu0 0.0
    %375 = vmatpush1.msra.mxu0 0.0
    %376 = vmatprep.subr.mxu0 0.0
    %377 = vmatpush1.msra.mxu0 0.0
    %378 = vmatprep.subr.mxu0 0.0
    %379 = vmatpush1.msra.mxu0 0.0
    %380 = vmatprep.mubr.f32.mxu0 0.0
    %381 = vmatmul.mubr.f32.gmra.mrb[0].mxu0 %v60
    %v382 = vpop.f32.mrb[0].mxu0
    %v383 = vadd.f32 0.0, %v382
    %v384 = vpop.f32.mrb[0].mxu0
    %385 = vdwg.mxu0
    %v386 = vmax.f32 %v383, 0.0
    %387 = vmatprep.subr.mxu0 0.0
    %388 = vmatpush1.msra.mxu0 %v386
    %389 = vmatprep.subr.mxu0 0.0
    %390 = vmatpush1.msra.mxu0 0.0
    %391 = vmatprep.subr.mxu0 0.0
    %392 = vmatpush1.msra.mxu0 0.0
    %393 = vmatprep.subr.mxu0 0.0
    %394 = vmatpush1.msra.mxu0 0.0
    %395 = vmatprep.subr.mxu0 0.0
    %396 = vmatpush1.msra.mxu0 0.0
    %397 = vmatprep.subr.mxu0 0.0
    %398 = vmatpush1.msra.mxu0 0.0
    %399 = vmatprep.subr.mxu0 0.0
    %400 = vmatpush1.msra.mxu0 0.0
    %401 = vmatprep.subr.mxu0 0.0
    %402 = vmatpush1.msra.mxu0 0.0
    %403 = vmatprep.subr.mxu0 0.0
    %404 = vmatpush1.msra.mxu0 0.0
    %405 = vmatprep.subr.mxu0 0.0
    %406 = vmatpush1.msra.mxu0 0.0
    %407 = vmatprep.subr.mxu0 0.0
    %408 = vmatpush1.msra.mxu0 0.0
    %409 = vmatprep.subr.mxu0 0.0
    %410 = vmatpush1.msra.mxu0 0.0
    %411 = vmatprep.subr.mxu0 0.0
    %412 = vmatpush1.msra.mxu0 0.0
    %413 = vmatprep.subr.mxu0 0.0
    %414 = vmatpush1.msra.mxu0 0.0
    %415 = vmatprep.subr.mxu0 0.0
    %416 = vmatpush1.msra.mxu0 0.0
    %417 = vmatprep.subr.mxu0 0.0
    %418 = vmatpush1.msra.mxu0 0.0
    %419 = vmatprep.subr.mxu0 0.0
    %420 = vmatpush1.msra.mxu0 0.0
    %421 = vmatprep.subr.mxu0 0.0
    %422 = vmatpush1.msra.mxu0 0.0
    %423 = vmatprep.subr.mxu0 0.0
    %424 = vmatpush1.msra.mxu0 0.0
    %425 = vmatprep.subr.mxu0 0.0
    %426 = vmatpush1.msra.mxu0 0.0
    %427 = vmatprep.subr.mxu0 0.0
    %428 = vmatpush1.msra.mxu0 0.0
    %429 = vmatprep.subr.mxu0 0.0
    %430 = vmatpush1.msra.mxu0 0.0
    %431 = vmatprep.subr.mxu0 0.0
    %432 = vmatpush1.msra.mxu0 0.0
    %433 = vmatprep.subr.mxu0 0.0
    %434 = vmatpush1.msra.mxu0 0.0
    %435 = vmatprep.subr.mxu0 0.0
    %436 = vmatpush1.msra.mxu0 0.0
    %437 = vmatprep.subr.mxu0 0.0
    %438 = vmatpush1.msra.mxu0 0.0
    %439 = vmatprep.subr.mxu0 0.0
    %440 = vmatpush1.msra.mxu0 0.0
    %441 = vmatprep.subr.mxu0 0.0
    %442 = vmatpush1.msra.mxu0 0.0
    %443 = vmatprep.subr.mxu0 0.0
    %444 = vmatpush1.msra.mxu0 0.0
    %445 = vmatprep.subr.mxu0 0.0
    %446 = vmatpush1.msra.mxu0 0.0
    %447 = vmatprep.subr.mxu0 0.0
    %448 = vmatpush1.msra.mxu0 0.0
    %449 = vmatprep.subr.mxu0 0.0
    %450 = vmatpush1.msra.mxu0 0.0
    %451 = vmatprep.mubr.f32.mxu0 0.0
    %452 = vmatmul.mubr.f32.gmra.mrb[0].mxu0 %v135
    %v453 = vpop.f32.mrb[0].mxu0
    %v454 = vadd.f32 0.0, %v453
    %v455 = vpop.f32.mrb[0].mxu0
    %456 = vmatprep.mubr.f32.mxu0 0.0
    %457 = vmatmul.mubr.f32.gmra.mrb[0].mxu0 %v138
    %v458 = vpop.f32.mrb[0].mxu0
    %v459 = vadd.f32 0.0, %v458
    %v460 = vpop.f32.mrb[0].mxu0
    %461 = vmatprep.mubr.f32.mxu0 0.0
    %462 = vmatmul.mubr.f32.gmra.mrb[0].mxu0 %v141
    %v463 = vpop.f32.mrb[0].mxu0
    %v464 = vadd.f32 0.0, %v463
    %v465 = vpop.f32.mrb[0].mxu0
    %466 = vmatprep.mubr.f32.mxu0 0.0
    %467 = vmatmul.mubr.f32.gmra.mrb[0].mxu0 %v144
    %v468 = vpop.f32.mrb[0].mxu0
    %v469 = vadd.f32 0.0, %v468
    %v470 = vpop.f32.mrb[0].mxu0
    %471 = vdwg.mxu0
    %v472 = vxor.u32 %v454, 2147483648
    %v473 = vxor.u32 %v459, 2147483648
    %v474 = vxor.u32 %v464, 2147483648
    %v475 = vxor.u32 %v469, 2147483648
    %v476 = vmul.f32 %v472, 1.442695
    %v477 = vpow.pop %v476
    %v478 = vmul.f32 %v473, 1.442695
    %v479 = vpow.pop %v478
    %v480 = vmul.f32 %v474, 1.442695
    %v481 = vpow.pop %v480
    %v482 = vmul.f32 %v475, 1.442695
    %v483 = vpow.pop %v482
    %v484 = vadd.f32 %v477, 1.0
    %v485 = vadd.f32 %v479, 1.0
    %v486 = vadd.f32 %v481, 1.0
    %v487 = vadd.f32 %v483, 1.0
    %v488 = vrcp.pop %v484
    %v489 = vmul.f32 1.0, %v488
    %v490 = vrcp.pop %v485
    %v491 = vmul.f32 1.0, %v490
    %v492 = vrcp.pop %v486
    %v493 = vmul.f32 1.0, %v492
    %v494 = vrcp.pop %v487
    %v495 = vmul.f32 1.0, %v494
    %497 = vset.pattern.permute.xlu0 0
    %498 = vperm.xlu0 %497, %v489
    %v499 = vpop.permute.xlu0 %498
    %502 = vset.pattern.permute.xlu0 0
    %503 = vperm.xlu0 %502, %v491
    %v504 = vpop.permute.xlu0 %503
    %507 = vset.pattern.permute.xlu0 0
    %508 = vperm.xlu0 %507, %v493
    %v509 = vpop.permute.xlu0 %508
    %512 = vset.pattern.permute.xlu0 0
    %513 = vperm.xlu0 %512, %v495
    %v514 = vpop.permute.xlu0 %513
    %v516 = vmul.f32 %v292, %v499
    %v517 = vmul.f32 %v293, %v499
    %v518 = vmul.f32 %v294, %v504
    %v519 = vmul.f32 %v295, %v504
    %v520 = vmul.f32 %v296, %v509
    %v521 = vmul.f32 %v297, %v509
    %v522 = vmul.f32 %v298, %v514
    %v523 = vmul.f32 %v299, %v514
    %s524 = scalar_lea.vmem [#allocation5], 64
    %525 = vst [vmem:[%s524] sm:$0xff] %v516
    %526 = vst [vmem:[%s524 + $0x8] sm:$0xff] %v517
    %527 = vst [vmem:[%s524 + $0x10] sm:$0xff] %v518
    %528 = vst [vmem:[%s524 + $0x18] sm:$0xff] %v519
    %529 = vst [vmem:[%s524 + $0x20] sm:$0xff] %v520
    %530 = vst [vmem:[%s524 + $0x28] sm:$0xff] %v521
    %531 = vst [vmem:[%s524 + $0x30] sm:$0xff] %v522
    %532 = vst [vmem:[%s524 + $0x38] sm:$0xff] %v523
    // Predicated region
    $region18: #{tpu_custom_call.1} parent=1 // pred_check
      _
    $region19: #{tpu_custom_call.1} parent=1 // pred_check_branch
      %534 = sbr.rel (0) target = $region21
    $region20: #{tpu_custom_call.1} parent=1 // pred_region
      %s536 = ssub.s32 2048, 2048
      %537 = vsyncadd [#allocation4], %s536
      %s538 = sshll.u32 [#allocation5], 4
      %s539 = int_to_ptr.vmem [resolvable:$true] %s538
      %544 = dma.vmem_to_hbm [thread:$0]  %s539, 2048, %s3, [#allocation4], 256, 256, 16
    $region21: #{tpu_custom_call.1} parent=1 // pred_fallthru
      _
    // Predicated region
    $region22: #{tpu_custom_call.1} parent=1 // pred_check
      _
    $region23: #{tpu_custom_call.1} parent=1 // pred_check_branch
      %546 = sbr.rel (0) target = $region25
    $region24: #{tpu_custom_call.1} parent=1 // pred_region
      %547 = dma.done [#allocation4], 2048
    $region25: #{tpu_custom_call.1} parent=1 // pred_fallthru
      _
    %548 = vsyncpa [#allocation3], 1
    %549 = vsyncpa [#allocation4], 1

</llo_original>
